<compile_context>
chip_gen: v7x
topology: tpu7x:2x2x1
jax: 0.10.0
libtpu: 0.0.40
codegen_flags: <defaults>
</compile_context>

<pallas_src>
import functools

import numpy as np

import jax
import jax.numpy as jnp
from jax import lax
from jax.experimental import pallas as pl
from jax.experimental.pallas import tpu as pltpu


def _round_up(x, m):
    return ((x + m - 1) // m) * m


def _svm_loss_kernel(i_map_ref, j_map_ref,          # scalar-prefetch tile tables (SMEM)
                     lab_col_ref, lab_row_ref,      # (1, tn) col-tile labels, (tn, 1) row-tile labels
                     frow_ref, fcol_ref,            # (tn, tk) feature chunks
                     out_ref,                       # (1, 8, tn) partial sums for this tile pair
                     acc_ref,                       # (tn, tn) f32 score accumulator
                     *, margin, n_valid, n_pad, tn, use_bf16):
    t = pl.program_id(0)
    k = pl.program_id(1)
    nk = pl.num_programs(1)
    i = i_map_ref[t]
    j = j_map_ref[t]

    # Zero the score accumulator at the start of every D sweep.
    @pl.when(k == 0)
    def _():
        acc_ref[...] = jnp.zeros_like(acc_ref)

    cdt = jnp.bfloat16 if use_bf16 else jnp.float32
    a = frow_ref[...].astype(cdt)
    b = fcol_ref[...].astype(cdt)

    # S_ij[r, c] += <f_row_r, f_col_c> — contract dim 1 of BOTH operands,
    # no transposed copy of the feature tile.
    acc_ref[...] += lax.dot_general(
        a, b,
        dimension_numbers=(((1,), (1,)), ((), ())),
        preferred_element_type=jnp.float32)

    # Epilogue for this (i, j) score tile: hinge for block (i, j) AND its mirror
    # block (j, i) (scores are symmetric), mask padding, dense partial reduce.
    @pl.when(k == nk - 1)
    def _():
        scores = acc_ref[...]                                        # (tn, tn)
        m = jnp.float32(margin)
        lab_c = lab_col_ref[...].astype(jnp.float32) * 2.0 - 1.0     # (1, tn)  labels of col tile j
        lab_r = lab_row_ref[...].astype(jnp.float32) * 2.0 - 1.0     # (tn, 1)  labels of row tile i

        hinge = jnp.maximum(m - lab_c * scores, 0.0)                 # block (i, j)
        mirror = jnp.maximum(m - lab_r * scores, 0.0)                # block (j, i), re-indexed onto S_ij
        off_diag = jnp.where(i == j, 0.0, 1.0)                       # diagonal tiles counted once
        total = hinge + off_diag * mirror

        if n_valid != n_pad:  # static: only emit masking when padding exists
            rows = i * tn + lax.broadcasted_iota(jnp.int32, (tn, 1), 0)
            cols = j * tn + lax.broadcasted_iota(jnp.int32, (1, tn), 1)
            total = total * (rows < n_valid).astype(jnp.float32)
            total = total * (cols < n_valid).astype(jnp.float32)

        # Fold sublane groups so the partial output stays a dense (8, tn) tile
        # (no scalar accumulator, no masked vst).
        part = total.reshape(tn // 8, 8, tn).sum(axis=0)             # (8, tn)
        out_ref[...] = part[None, :, :]


def svm_loss(features, labels, margin=1.0, *, tile_n=512, tile_k=512,
             use_bf16=False):
    """features: (N, D), labels: (N,) in {0, 1} -> scalar hinge loss."""
    n, d = features.shape

    # Tile sizes: lane/MXU aligned, clamped for small problems.
    tn = _round_up(min(tile_n, _round_up(n, 128)), 128)   # row & col score tile
    tk = _round_up(min(tile_k, _round_up(d, 128)), 128)   # D chunk

    n_pad = _round_up(n, tn)
    d_pad = _round_up(d, tk)

    # Pad in native dtype (cast happens in-kernel); padded entries are masked.
    feats = jnp.pad(features, ((0, n_pad - n), (0, d_pad - d)))
    labs_1xn = jnp.pad(labels.reshape(1, n), ((0, 0), (0, n_pad - n)))   # col-tile layout
    labs_nx1 = jnp.pad(labels.reshape(n, 1), ((0, n_pad - n), (0, 0)))   # row-tile layout

    num_n = n_pad // tn
    num_k = d_pad // tk

    # Upper-triangular tile schedule (i <= j): scalar-prefetched lookup tables.
    pairs = [(i, j) for i in range(num_n) for j in range(i, num_n)]
    num_t = len(pairs)
    i_idx = jnp.asarray(np.array([p[0] for p in pairs], dtype=np.int32))
    j_idx = jnp.asarray(np.array([p[1] for p in pairs], dtype=np.int32))

    kernel = functools.partial(
        _svm_loss_kernel,
        margin=float(margin), n_valid=n, n_pad=n_pad, tn=tn, use_bf16=use_bf16)

    grid_spec = pltpu.PrefetchScalarGridSpec(
        num_scalar_prefetch=2,
        grid=(num_t, num_k),
        in_specs=[
            pl.BlockSpec((1, tn), lambda t, k, im, jm: (0, jm[t])),    # labels of col tile j
            pl.BlockSpec((tn, 1), lambda t, k, im, jm: (im[t], 0)),    # labels of row tile i
            pl.BlockSpec((tn, tk), lambda t, k, im, jm: (im[t], k)),   # feature row tile
            pl.BlockSpec((tn, tk), lambda t, k, im, jm: (jm[t], k)),   # feature col tile
        ],
        out_specs=pl.BlockSpec((1, 8, tn), lambda t, k, im, jm: (t, 0, 0)),
        scratch_shapes=[pltpu.VMEM((tn, tn), jnp.float32)],            # score accumulator
    )

    itemsize = feats.dtype.itemsize
    cost = pl.CostEstimate(
        flops=2 * num_t * num_k * tn * tn * tk + 8 * num_t * tn * tn,
        transcendentals=0,
        bytes_accessed=(2 * num_t * num_k * tn * tk * itemsize
                        + 2 * num_t * tn * labs_1xn.dtype.itemsize
                        + num_t * 8 * tn * 4),
    )

    partials = pl.pallas_call(
        kernel,
        out_shape=jax.ShapeDtypeStruct((num_t, 8, tn), jnp.float32),
        grid_spec=grid_spec,
        compiler_params=pltpu.CompilerParams(
            dimension_semantics=("parallel", "arbitrary")),
        cost_estimate=cost,
    )(i_idx, j_idx, labs_1xn, labs_nx1, feats, feats)

    # Tiny final reduction + compile-time-constant mean divisor.
    return jnp.sum(partials) * (1.0 / (n * n))


def _ref_loss(features, labels, margin=1.0):
    lab_pm = labels.astype(jnp.float32) * 2.0 - 1.0
    scores = features.astype(jnp.float32) @ features.astype(jnp.float32).T
    return jnp.mean(jnp.maximum(margin - lab_pm[None, :] * scores, 0.0))


if __name__ == "__main__":
    key = jax.random.PRNGKey(0)

    # Case 1: small batch (matches module usage: N feature vectors of dim D).
    k1, k2 = jax.random.split(key)
    N, D = 8, 32
    features = jax.random.normal(k1, (N, D), dtype=jnp.float32)
    labels = jax.random.bernoulli(k2, p=0.5, shape=(N,)).astype(jnp.float32)

    loss = svm_loss(features, labels, margin=1.0)
    jax.block_until_ready(loss)
    loss_ref = _ref_loss(features, labels, margin=1.0)
    assert jnp.allclose(loss, loss_ref, rtol=1e-5, atol=1e-5), (loss, loss_ref)

    # Case 2: multi-tile triangular grid with padding/masking exercised
    # (N, D not tile multiples; diagonal + off-diagonal tile pairs).
    k3, k4 = jax.random.split(k2)
    N2, D2 = 300, 96
    features2 = jax.random.normal(k3, (N2, D2), dtype=jnp.float32) * 0.1
    labels2 = jax.random.bernoulli(k4, p=0.5, shape=(N2,)).astype(jnp.float32)

    loss2 = svm_loss(features2, labels2, margin=1.0, tile_n=128, tile_k=128)
    jax.block_until_ready(loss2)
    loss2_ref = _ref_loss(features2, labels2, margin=1.0)
    assert jnp.allclose(loss2, loss2_ref, rtol=1e-5, atol=1e-5), (loss2, loss2_ref)

    # Case 3: tile-aligned shapes (mask path statically elided), multi-tile,
    # multiple K chunks.
    k5, k6 = jax.random.split(k4)
    N3, D3 = 256, 256
    features3 = jax.random.normal(k5, (N3, D3), dtype=jnp.float32) * 0.1
    labels3 = jax.random.bernoulli(k6, p=0.5, shape=(N3,)).astype(jnp.float32)

    loss3 = svm_loss(features3, labels3, margin=1.0, tile_n=128, tile_k=128)
    jax.block_until_ready(loss3)
    loss3_ref = _ref_loss(features3, labels3, margin=1.0)
    assert jnp.allclose(loss3, loss3_ref, rtol=1e-5, atol=1e-5), (loss3, loss3_ref)

    print("KERNEL_OK")
</pallas_src>

<mosaic_0001>
module attributes {stable_mosaic.version = 11 : i64} {
  func.func @_svm_loss_kernel(%arg0: i32, %arg1: i32, %arg2: memref<1xi32, #tpu.memory_space<smem>>, %arg3: memref<1xi32, #tpu.memory_space<smem>>, %arg4: memref<1x128xf32, #tpu.memory_space<vmem>>, %arg5: memref<128x1xf32, #tpu.memory_space<vmem>>, %arg6: memref<128x128xf32, #tpu.memory_space<vmem>>, %arg7: memref<128x128xf32, #tpu.memory_space<vmem>>, %arg8: memref<1x8x128xf32, #tpu.memory_space<vmem>>, %arg9: memref<128x128xf32, #tpu.memory_space<vmem>>) attributes {dimension_semantics = [#tpu.dimension_semantics<parallel>, #tpu.dimension_semantics<arbitrary>], iteration_bounds = array<i64: 1, 1>, scalar_prefetch = 2 : i64, scratch_operands = 1 : i64, tpu.core_type = #tpu.core_type<tc>, window_params = [{transform_indices = @transform_0, window_bounds = array<i64: 1, 128>}, {transform_indices = @transform_1, window_bounds = array<i64: 128, 1>}, {transform_indices = @transform_2, window_bounds = array<i64: 128, 128>}, {transform_indices = @transform_3, window_bounds = array<i64: 128, 128>}, {transform_indices = @transform_4, window_bounds = array<i64: 1, 8, 128>}]} {
    %0 = arith.index_cast %arg0 : i32 to index
    %1 = memref.load %arg2[%0] : memref<1xi32, #tpu.memory_space<smem>>
    %2 = arith.index_cast %arg0 : i32 to index
    %3 = memref.load %arg3[%2] : memref<1xi32, #tpu.memory_space<smem>>
    %c0_i32 = arith.constant 0 : i32
    %4 = arith.cmpi eq, %arg1, %c0_i32 : i32
    %5 = arith.extui %4 : i1 to i32
    %c0_i32_0 = arith.constant 0 : i32
    %6 = arith.cmpi ne, %5, %c0_i32_0 : i32
    scf.if %6 {
      %cst_10 = arith.constant 0.000000e+00 : f32
      %16 = vector.broadcast %cst_10 : f32 to vector<128x128xf32>
      %c0_11 = arith.constant 0 : index
      %c0_12 = arith.constant 0 : index
      %17 = vector.load %arg9[%c0_11, %c0_12] : memref<128x128xf32, #tpu.memory_space<vmem>>, vector<128x128xf32>
      tpu.vector_store %arg9[%c0_11, %c0_12], %16 {strides = array<i32>} : memref<128x128xf32, #tpu.memory_space<vmem>>, vector<128x128xf32>,
    } else {
    }
    %c0 = arith.constant 0 : index
    %c0_1 = arith.constant 0 : index
    %7 = vector.load %arg6[%c0, %c0_1] : memref<128x128xf32, #tpu.memory_space<vmem>>, vector<128x128xf32>
    %c0_2 = arith.constant 0 : index
    %c0_3 = arith.constant 0 : index
    %8 = vector.load %arg7[%c0_2, %c0_3] : memref<128x128xf32, #tpu.memory_space<vmem>>, vector<128x128xf32>
    %c0_4 = arith.constant 0 : index
    %c0_5 = arith.constant 0 : index
    %9 = vector.load %arg9[%c0_4, %c0_5] : memref<128x128xf32, #tpu.memory_space<vmem>>, vector<128x128xf32>
    %cst = arith.constant dense<0.000000e+00> : vector<128x128xf32>
    %10 = tpu.matmul %7, %8, %cst {dimension_numbers = #tpu.dot_dimension_numbers<[1], [1], [0], [0], [0, 0, 1, 0], [], []>} : vector<128x128xf32>, vector<128x128xf32>, vector<128x128xf32> -> vector<128x128xf32>
    %11 = arith.addf %9, %10 : vector<128x128xf32>
    %c0_6 = arith.constant 0 : index
    %c0_7 = arith.constant 0 : index
    %12 = vector.load %arg9[%c0_6, %c0_7] : memref<128x128xf32, #tpu.memory_space<vmem>>, vector<128x128xf32>
    tpu.vector_store %arg9[%c0_6, %c0_7], %11 {strides = array<i32>} : memref<128x128xf32, #tpu.memory_space<vmem>>, vector<128x128xf32>,
    %c0_i32_8 = arith.constant 0 : i32
    %13 = arith.cmpi eq, %arg1, %c0_i32_8 : i32
    %14 = arith.extui %13 : i1 to i32
    %c0_i32_9 = arith.constant 0 : i32
    %15 = arith.cmpi ne, %14, %c0_i32_9 : i32
    scf.if %15 {
      %c0_10 = arith.constant 0 : index
      %c0_11 = arith.constant 0 : index
      %16 = vector.load %arg9[%c0_10, %c0_11] : memref<128x128xf32, #tpu.memory_space<vmem>>, vector<128x128xf32>
      %c0_12 = arith.constant 0 : index
      %c0_13 = arith.constant 0 : index
      %17 = vector.load %arg4[%c0_12, %c0_13] : memref<1x128xf32, #tpu.memory_space<vmem>>, vector<1x128xf32>
      %cst_14 = arith.constant 2.000000e+00 : f32
      %18 = vector.broadcast %cst_14 : f32 to vector<1x128xf32>
      %19 = arith.mulf %17, %18 : vector<1x128xf32>
      %cst_15 = arith.constant 1.000000e+00 : f32
      %20 = vector.broadcast %cst_15 : f32 to vector<1x128xf32>
      %21 = arith.subf %19, %20 : vector<1x128xf32>
      %c0_16 = arith.constant 0 : index
      %c0_17 = arith.constant 0 : index
      %22 = vector.load %arg5[%c0_16, %c0_17] : memref<128x1xf32, #tpu.memory_space<vmem>>, vector<128x1xf32>
      %cst_18 = arith.constant 2.000000e+00 : f32
      %23 = vector.broadcast %cst_18 : f32 to vector<128x1xf32>
      %24 = arith.mulf %22, %23 : vector<128x1xf32>
      %cst_19 = arith.constant 1.000000e+00 : f32
      %25 = vector.broadcast %cst_19 : f32 to vector<128x1xf32>
      %26 = arith.subf %24, %25 : vector<128x1xf32>
      %27 = vector.broadcast %21 : vector<1x128xf32> to vector<128x128xf32>
      %28 = arith.mulf %27, %16 : vector<128x128xf32>
      %cst_20 = arith.constant 1.000000e+00 : f32
      %29 = vector.broadcast %cst_20 : f32 to vector<128x128xf32>
      %30 = arith.subf %29, %28 : vector<128x128xf32>
      %cst_21 = arith.constant 0.000000e+00 : f32
      %31 = vector.broadcast %cst_21 : f32 to vector<128x128xf32>
      %32 = arith.maximumf %30, %31 : vector<128x128xf32>
      %33 = vector.broadcast %26 : vector<128x1xf32> to vector<128x128xf32>
      %34 = arith.mulf %33, %16 : vector<128x128xf32>
      %cst_22 = arith.constant 1.000000e+00 : f32
      %35 = vector.broadcast %cst_22 : f32 to vector<128x128xf32>
      %36 = arith.subf %35, %34 : vector<128x128xf32>
      %cst_23 = arith.constant 0.000000e+00 : f32
      %37 = vector.broadcast %cst_23 : f32 to vector<128x128xf32>
      %38 = arith.maximumf %36, %37 : vector<128x128xf32>
      %39 = arith.cmpi eq, %1, %3 : i32
      %cst_24 = arith.constant 0.000000e+00 : f32
      %cst_25 = arith.constant 1.000000e+00 : f32
      %40 = arith.select %39, %cst_24, %cst_25 : f32
      %41 = vector.broadcast %40 : f32 to vector<128x128xf32>
      %42 = arith.mulf %41, %38 : vector<128x128xf32>
      %43 = arith.addf %32, %42 : vector<128x128xf32>
      %c128_i32 = arith.constant 128 : i32
      %44 = arith.muli %1, %c128_i32 : i32
      %45 = tpu.iota {dimensions = array<i32: 0>} : vector<128x1xi32>
      %46 = vector.broadcast %44 : i32 to vector<128x1xi32>
      %47 = arith.addi %46, %45 : vector<128x1xi32>
      %c128_i32_26 = arith.constant 128 : i32
      %48 = arith.muli %3, %c128_i32_26 : i32
      %49 = tpu.iota {dimensions = array<i32: 1>} : vector<1x128xi32>
      %50 = vector.broadcast %48 : i32 to vector<1x128xi32>
      %51 = arith.addi %50, %49 : vector<1x128xi32>
      %c8_i32 = arith.constant 8 : i32
      %52 = vector.broadcast %c8_i32 : i32 to vector<128x1xi32>
      %53 = arith.cmpi slt, %47, %52 : vector<128x1xi32>
      %54 = arith.extui %53 : vector<128x1xi1> to vector<128x1xi32>
      %55 = arith.sitofp %54 : vector<128x1xi32> to vector<128x1xf32>
      %56 = vector.broadcast %55 : vector<128x1xf32> to vector<128x128xf32>
      %57 = arith.mulf %43, %56 : vector<128x128xf32>
      %c8_i32_27 = arith.constant 8 : i32
      %58 = vector.broadcast %c8_i32_27 : i32 to vector<1x128xi32>
      %59 = arith.cmpi slt, %51, %58 : vector<1x128xi32>
      %60 = arith.extui %59 : vector<1x128xi1> to vector<1x128xi32>
      %61 = arith.sitofp %60 : vector<1x128xi32> to vector<1x128xf32>
      %62 = vector.broadcast %61 : vector<1x128xf32> to vector<128x128xf32>
      %63 = arith.mulf %57, %62 : vector<128x128xf32>
      %64 = vector.shape_cast %63 : vector<128x128xf32> to vector<16x8x128xf32>
      %cst_28 = arith.constant dense<0.000000e+00> : vector<8x128xf32>
      %65 = vector.multi_reduction <add>, %64, %cst_28 [0] : vector<16x8x128xf32> to vector<8x128xf32>
      %66 = vector.shape_cast %65 : vector<8x128xf32> to vector<1x8x128xf32>
      %c0_29 = arith.constant 0 : index
      %c0_30 = arith.constant 0 : index
      %c0_31 = arith.constant 0 : index
      %67 = vector.load %arg8[%c0_29, %c0_30, %c0_31] : memref<1x8x128xf32, #tpu.memory_space<vmem>>, vector<1x8x128xf32>
      tpu.vector_store %arg8[%c0_29, %c0_30, %c0_31], %66 {strides = array<i32>} : memref<1x8x128xf32, #tpu.memory_space<vmem>>, vector<1x8x128xf32>,
    } else {
    }
    return
  }
  func.func @transform_0(%arg0: i32, %arg1: i32, %arg2: memref<1xi32, #tpu.memory_space<smem>>, %arg3: memref<1xi32, #tpu.memory_space<smem>>) -> (i32, i32) {
    %0 = arith.index_cast %arg0 : i32 to index
    %1 = memref.load %arg3[%0] : memref<1xi32, #tpu.memory_space<smem>>
    %c0_i32 = arith.constant 0 : i32
    %c0_i32_0 = arith.constant 0 : i32
    return %c0_i32, %1 : i32, i32
  }
  func.func @transform_1(%arg0: i32, %arg1: i32, %arg2: memref<1xi32, #tpu.memory_space<smem>>, %arg3: memref<1xi32, #tpu.memory_space<smem>>) -> (i32, i32) {
    %0 = arith.index_cast %arg0 : i32 to index
    %1 = memref.load %arg2[%0] : memref<1xi32, #tpu.memory_space<smem>>
    %c0_i32 = arith.constant 0 : i32
    %c0_i32_0 = arith.constant 0 : i32
    return %1, %c0_i32 : i32, i32
  }
  func.func @transform_2(%arg0: i32, %arg1: i32, %arg2: memref<1xi32, #tpu.memory_space<smem>>, %arg3: memref<1xi32, #tpu.memory_space<smem>>) -> (i32, i32) {
    %0 = arith.index_cast %arg0 : i32 to index
    %1 = memref.load %arg2[%0] : memref<1xi32, #tpu.memory_space<smem>>
    %c0_i32 = arith.constant 0 : i32
    return %1, %arg1 : i32, i32
  }
  func.func @transform_3(%arg0: i32, %arg1: i32, %arg2: memref<1xi32, #tpu.memory_space<smem>>, %arg3: memref<1xi32, #tpu.memory_space<smem>>) -> (i32, i32) {
    %0 = arith.index_cast %arg0 : i32 to index
    %1 = memref.load %arg3[%0] : memref<1xi32, #tpu.memory_space<smem>>
    %c0_i32 = arith.constant 0 : i32
    return %1, %arg1 : i32, i32
  }
  func.func @transform_4(%arg0: i32, %arg1: i32, %arg2: memref<1xi32, #tpu.memory_space<smem>>, %arg3: memref<1xi32, #tpu.memory_space<smem>>) -> (i32, i32, i32) {
    %c0_i32 = arith.constant 0 : i32
    %c0_i32_0 = arith.constant 0 : i32
    %c0_i32_1 = arith.constant 0 : i32
    return %arg0, %c0_i32, %c0_i32_0 : i32, i32, i32
  }
}

</mosaic_0001>

<llo_original>
// kernel: tpu_custom_call.1
$region0: #{tpu_custom_call.1}
  #allocation0 [shape = 'u32[]', space=smem, size = 0x4, offset = 0x4, fixed_abs, tag = 'smem constant byte address 0x4 - core index']
  #allocation1 [shape = 'u32[144,128]{1,0:T(1,128)}', space=vmem, size = 0x12000, scoped, tag = 'internal scratch']
  #allocation2 [shape = 'f32[128,128]{1,0:T(8,128)}', space=vmem, size = 0x10000, scoped, tag = 'scratch operand']
  #allocation3 [shape = 's32[1]{0}', space=sflag, size = 0x4, scoped, tag = 'scoped memory for tpu_custom_call.1']
  #allocation4 [shape = 's32[1]{0:T(128)S(6)}', space=smem, size = 0x200, scoped, tag = 'prefetched SMEM operand 0']
  #allocation5 [shape = 's32[1]{0:T(128)S(6)}', space=smem, size = 0x200, scoped, tag = 'prefetched SMEM operand 1']
  %s0 = inlined_call_operand.<no memory space> [shape: s32[1], index: 0, kind: input, shape index: {}]
  %s1 = inlined_call_operand.<no memory space> [shape: s32[1], index: 1, kind: input, shape index: {}]
  %s2 = inlined_call_operand.vmem [shape: f32[1,128], index: 2, kind: input, shape index: {}]
  %s3 = inlined_call_operand.vmem [shape: f32[128,1], index: 3, kind: input, shape index: {}]
  %s4 = inlined_call_operand.vmem [shape: f32[128,128], index: 4, kind: input, shape index: {}]
  %s5 = inlined_call_operand.hbm [shape: f32[128,128], index: 5, kind: input, shape index: {}]
  %s6 = inlined_call_operand.hbm [shape: f32[1,8,128], index: 6, kind: output, shape index: {}]
  %s7 = sld [smem:[#allocation0]]
  $region38: #{tpu_custom_call.1} parent=0
    _
  %s9 = ssub.s32 1, %s7
  %s10 = scalar_select 0, %s9, %s7
  %11 = sst [smem:[#allocation4]] %s0
  %12 = sst [smem:[#allocation5]] %s1
  $region1: #{tpu_custom_call.1} parent=0
    #allocation6 [shape = 'u8[65536]{0}', space=vmem, size = 0x10000, scoped, tag = 'input window, operand 5, single buffered']
    #allocation7 [shape = 's32[1]{0}', space=sflag, size = 0x4, scoped, tag = 'scoped memory for tpu_custom_call.1']
    #allocation8 [shape = 's32[1]{0}', space=sflag, size = 0x4, scoped, tag = 'scoped memory for tpu_custom_call.1']
    #allocation9 [shape = 'u8[4096]{0}', space=vmem, size = 0x1000, scoped, tag = 'output window, operand 0, single buffered']
    %13 = vsyncpa [#allocation7], 0
    %14 = vsyncpa [#allocation8], 0
    // Predicated region
    $region2: #{tpu_custom_call.1} parent=1 // pred_check
      _
    $region3: #{tpu_custom_call.1} parent=1 // pred_check_branch
      %16 = sbr.rel (0) target = $region5
    $region4: #{tpu_custom_call.1} parent=1 // pred_region
      %s17 = sld [smem:[#allocation5]]
      %p18 = scmp.lt.s32.totalorder %s17, 0
      %s19 = scalar_select %p18, %s17, 0
      %s20 = scalar_lea.vmem %s2, %s19
      %s21 = sld [smem:[#allocation5]]
    $region5: #{tpu_custom_call.1} parent=1 // pred_fallthru
      _
    // Predicated region
    $region6: #{tpu_custom_call.1} parent=1 // pred_check
      _
    $region7: #{tpu_custom_call.1} parent=1 // pred_check_branch
      %23 = sbr.rel (0) target = $region9
    $region8: #{tpu_custom_call.1} parent=1 // pred_region
      %s24 = sld [smem:[#allocation4]]
      %s25 = smul.u32 16, %s24
      %p26 = scmp.lt.s32.totalorder %s25, 15
      %s27 = scalar_select %p26, %s25, 15
      %s28 = smul.addr %s27, 8
      %s29 = scalar_lea.vmem %s3, %s28
      %s30 = sld [smem:[#allocation4]]
      %s31 = smul.u32 16, %s30
    $region9: #{tpu_custom_call.1} parent=1 // pred_fallthru
      _
    // Predicated region
    $region10: #{tpu_custom_call.1} parent=1 // pred_check
      _
    $region11: #{tpu_custom_call.1} parent=1 // pred_check_branch
      %33 = sbr.rel (0) target = $region13
    $region12: #{tpu_custom_call.1} parent=1 // pred_region
      %s34 = sld [smem:[#allocation4]]
      %s35 = smul.u32 16, %s34
      %p36 = scmp.lt.s32.totalorder %s35, 15
      %s37 = scalar_select %p36, %s35, 15
      %s38 = smul.addr %s37, 8
      %s39 = scalar_lea.vmem %s4, %s38
      %s40 = sld [smem:[#allocation4]]
      %s41 = smul.u32 16, %s40
    $region13: #{tpu_custom_call.1} parent=1 // pred_fallthru
      _
    // Predicated region
    $region14: #{tpu_custom_call.1} parent=1 // pred_check
      _
    $region15: #{tpu_custom_call.1} parent=1 // pred_check_branch
      %43 = sbr.rel (0) target = $region17
    $region16: #{tpu_custom_call.1} parent=1 // pred_region
      %s44 = sld [smem:[#allocation5]]
      %s45 = smul.u32 16, %s44
      %s47 = ssub.s32 2048, 2048
      %48 = vsyncadd [#allocation7], %s47
      %s49 = smul.addr %s45, 128
      %s50 = scalar_lea.hbm %s5, %s49
      %s51 = sshll.u32 [#allocation6], 4
      %s52 = int_to_ptr.vmem [resolvable:$true] %s51
      %57 = dma.hbm_to_vmem [thread:$0]  %s50, 2048, %s52, [#allocation7], 128, 128, 8
    $region17: #{tpu_custom_call.1} parent=1 // pred_fallthru
      _
    // Predicated region
    $region18: #{tpu_custom_call.1} parent=1 // pred_check
      _
    $region19: #{tpu_custom_call.1} parent=1 // pred_check_branch
      %59 = sbr.rel (0) target = $region21
    $region20: #{tpu_custom_call.1} parent=1 // pred_region
      %60 = dma.done [#allocation7], 2048
    $region21: #{tpu_custom_call.1} parent=1 // pred_fallthru
      _
    %s61 = sld [smem:[#allocation5]]
    %p62 = scmp.lt.s32.totalorder %s61, 0
    %s63 = scalar_select %p62, %s61, 0
    %s64 = scalar_lea.vmem %s2, %s63
    %s65 = sld [smem:[#allocation4]]
    %s66 = smul.u32 16, %s65
    %p67 = scmp.lt.s32.totalorder %s66, 15
    %s68 = scalar_select %p67, %s66, 15
    %s69 = smul.addr %s68, 8
    %s70 = scalar_lea.vmem %s3, %s69
    %s71 = sld [smem:[#allocation4]]
    %s72 = smul.u32 16, %s71
    %p73 = scmp.lt.s32.totalorder %s72, 15
    %s74 = scalar_select %p73, %s72, 15
    %s75 = smul.addr %s74, 8
    %s76 = scalar_lea.vmem %s4, %s75
    %s77 = sld [smem:[#allocation5]]
    %p78 = scmp.lt.s32.totalorder %s77, 0
    %s79 = scalar_select %p78, %s77, 0
    %s80 = scalar_lea.vmem %s2, %s79
    %s81 = sld [smem:[#allocation5]]
    %s82 = sld [smem:[#allocation4]]
    %s83 = smul.u32 16, %s82
    %p84 = scmp.lt.s32.totalorder %s83, 15
    %s85 = scalar_select %p84, %s83, 15
    %s86 = smul.addr %s85, 8
    %s87 = scalar_lea.vmem %s3, %s86
    %s88 = sld [smem:[#allocation4]]
    %s89 = smul.u32 16, %s88
    %s90 = sld [smem:[#allocation4]]
    %s91 = smul.u32 16, %s90
    %p92 = scmp.lt.s32.totalorder %s91, 15
    %s93 = scalar_select %p92, %s91, 15
    %s94 = smul.addr %s93, 8
    %s95 = scalar_lea.vmem %s4, %s94
    %s96 = sld [smem:[#allocation4]]
    %s97 = smul.u32 16, %s96
    %s98 = sld [smem:[#allocation5]]
    %s99 = smul.u32 16, %s98
    %s100 = sld [smem:[#allocation4]]
    %s101 = sld [smem:[#allocation5]]
    %p102 = scmp.eq.s32.totalorder 0, 0
    // Predicated region
    $region22: #{tpu_custom_call.1} parent=1 // pred_check
      %p103 = pneg %p102
    $region23: #{tpu_custom_call.1} parent=1 // pred_check_branch
      %105 = sbr.rel (%p103) target = $region25
    $region24: #{tpu_custom_call.1} parent=1 // pred_region
      %106 = vst [vmem:[#allocation2] sm:$0xff] 0.0
      %107 = vst [vmem:[#allocation2 + $0x8] sm:$0xff] 0.0
      %108 = vst [vmem:[#allocation2 + $0x10] sm:$0xff] 0.0
      %109 = vst [vmem:[#allocation2 + $0x18] sm:$0xff] 0.0
      %110 = vst [vmem:[#allocation2 + $0x20] sm:$0xff] 0.0
      %111 = vst [vmem:[#allocation2 + $0x28] sm:$0xff] 0.0
      %112 = vst [vmem:[#allocation2 + $0x30] sm:$0xff] 0.0
      %113 = vst [vmem:[#allocation2 + $0x38] sm:$0xff] 0.0
      %114 = vst [vmem:[#allocation2 + $0x40] sm:$0xff] 0.0
      %115 = vst [vmem:[#allocation2 + $0x48] sm:$0xff] 0.0
      %116 = vst [vmem:[#allocation2 + $0x50] sm:$0xff] 0.0
      %117 = vst [vmem:[#allocation2 + $0x58] sm:$0xff] 0.0
      %118 = vst [vmem:[#allocation2 + $0x60] sm:$0xff] 0.0
      %119 = vst [vmem:[#allocation2 + $0x68] sm:$0xff] 0.0
      %120 = vst [vmem:[#allocation2 + $0x70] sm:$0xff] 0.0
      %121 = vst [vmem:[#allocation2 + $0x78] sm:$0xff] 0.0
    $region25: #{tpu_custom_call.1} parent=1 // pred_fallthru
      _
    %v122 = vld [vmem:[%s95] sm:$0xff]
    %v123 = vld [vmem:[%s95 + $0x8] sm:$0xff]
    %v124 = vld [vmem:[%s95 + $0x10] sm:$0xff]
    %v125 = vld [vmem:[%s95 + $0x18] sm:$0xff]
    %v126 = vld [vmem:[%s95 + $0x20] sm:$0xff]
    %v127 = vld [vmem:[%s95 + $0x28] sm:$0xff]
    %v128 = vld [vmem:[%s95 + $0x30] sm:$0xff]
    %v129 = vld [vmem:[%s95 + $0x38] sm:$0xff]
    %v130 = vld [vmem:[%s95 + $0x40] sm:$0xff]
    %v131 = vld [vmem:[%s95 + $0x48] sm:$0xff]
    %v132 = vld [vmem:[%s95 + $0x50] sm:$0xff]
    %v133 = vld [vmem:[%s95 + $0x58] sm:$0xff]
    %v134 = vld [vmem:[%s95 + $0x60] sm:$0xff]
    %v135 = vld [vmem:[%s95 + $0x68] sm:$0xff]
    %v136 = vld [vmem:[%s95 + $0x70] sm:$0xff]
    %v137 = vld [vmem:[%s95 + $0x78] sm:$0xff]
    %v138 = vld [vmem:[#allocation6] sm:$0xff]
    %v139 = vld [vmem:[#allocation6 + $0x8] sm:$0xff]
    %v140 = vld [vmem:[#allocation6 + $0x10] sm:$0xff]
    %v141 = vld [vmem:[#allocation6 + $0x18] sm:$0xff]
    %v142 = vld [vmem:[#allocation6 + $0x20] sm:$0xff]
    %v143 = vld [vmem:[#allocation6 + $0x28] sm:$0xff]
    %v144 = vld [vmem:[#allocation6 + $0x30] sm:$0xff]
    %v145 = vld [vmem:[#allocation6 + $0x38] sm:$0xff]
    %v146 = vld [vmem:[#allocation6 + $0x40] sm:$0xff]
    %v147 = vld [vmem:[#allocation6 + $0x48] sm:$0xff]
    %v148 = vld [vmem:[#allocation6 + $0x50] sm:$0xff]
    %v149 = vld [vmem:[#allocation6 + $0x58] sm:$0xff]
    %v150 = vld [vmem:[#allocation6 + $0x60] sm:$0xff]
    %v151 = vld [vmem:[#allocation6 + $0x68] sm:$0xff]
    %v152 = vld [vmem:[#allocation6 + $0x70] sm:$0xff]
    %v153 = vld [vmem:[#allocation6 + $0x78] sm:$0xff]
    %v154 = vld [vmem:[#allocation2] sm:$0xff]
    %v155 = vld [vmem:[#allocation2 + $0x8] sm:$0xff]
    %v156 = vld [vmem:[#allocation2 + $0x10] sm:$0xff]
    %v157 = vld [vmem:[#allocation2 + $0x18] sm:$0xff]
    %v158 = vld [vmem:[#allocation2 + $0x20] sm:$0xff]
    %v159 = vld [vmem:[#allocation2 + $0x28] sm:$0xff]
    %v160 = vld [vmem:[#allocation2 + $0x30] sm:$0xff]
    %v161 = vld [vmem:[#allocation2 + $0x38] sm:$0xff]
    %v162 = vld [vmem:[#allocation2 + $0x40] sm:$0xff]
    %v163 = vld [vmem:[#allocation2 + $0x48] sm:$0xff]
    %v164 = vld [vmem:[#allocation2 + $0x50] sm:$0xff]
    %v165 = vld [vmem:[#allocation2 + $0x58] sm:$0xff]
    %v166 = vld [vmem:[#allocation2 + $0x60] sm:$0xff]
    %v167 = vld [vmem:[#allocation2 + $0x68] sm:$0xff]
    %v168 = vld [vmem:[#allocation2 + $0x70] sm:$0xff]
    %v169 = vld [vmem:[#allocation2 + $0x78] sm:$0xff]
    %170 = vmatprep.subr.mxu0 0.0
    %171 = vmatpush1.xpose.msra.mxu0 %v138
    %172 = vmatprep.subr.mxu0 0.0
    %173 = vmatpush1.xpose.msra.mxu0 %v139
    %174 = vmatprep.subr.mxu0 0.0
    %175 = vmatpush1.xpose.msra.mxu0 %v140
    %176 = vmatprep.subr.mxu0 0.0
    %177 = vmatpush1.xpose.msra.mxu0 %v141
    %178 = vmatprep.subr.mxu0 0.0
    %179 = vmatpush1.xpose.msra.mxu0 %v142
    %180 = vmatprep.subr.mxu0 0.0
    %181 = vmatpush1.xpose.msra.mxu0 %v143
    %182 = vmatprep.subr.mxu0 0.0
    %183 = vmatpush1.xpose.msra.mxu0 %v144
    %184 = vmatprep.subr.mxu0 0.0
    %185 = vmatpush1.xpose.msra.mxu0 %v145
    %186 = vmatprep.subr.mxu0 0.0
    %187 = vmatpush1.xpose.msra.mxu0 %v146
    %188 = vmatprep.subr.mxu0 0.0
    %189 = vmatpush1.xpose.msra.mxu0 %v147
    %190 = vmatprep.subr.mxu0 0.0
    %191 = vmatpush1.xpose.msra.mxu0 %v148
    %192 = vmatprep.subr.mxu0 0.0
    %193 = vmatpush1.xpose.msra.mxu0 %v149
    %194 = vmatprep.subr.mxu0 0.0
    %195 = vmatpush1.xpose.msra.mxu0 %v150
    %196 = vmatprep.subr.mxu0 0.0
    %197 = vmatpush1.xpose.msra.mxu0 %v151
    %198 = vmatprep.subr.mxu0 0.0
    %199 = vmatpush1.xpose.msra.mxu0 %v152
    %200 = vmatprep.subr.mxu0 0.0
    %201 = vmatpush1.xpose.msra.mxu0 %v153
    %202 = vmatprep.subr.mxu0 0.0
    %203 = vmatpush1.xpose.msra.mxu0 0.0
    %204 = vmatprep.subr.mxu0 0.0
    %205 = vmatpush1.xpose.msra.mxu0 0.0
    %206 = vmatprep.subr.mxu0 0.0
    %207 = vmatpush1.xpose.msra.mxu0 0.0
    %208 = vmatprep.subr.mxu0 0.0
    %209 = vmatpush1.xpose.msra.mxu0 0.0
    %210 = vmatprep.subr.mxu0 0.0
    %211 = vmatpush1.xpose.msra.mxu0 0.0
    %212 = vmatprep.subr.mxu0 0.0
    %213 = vmatpush1.xpose.msra.mxu0 0.0
    %214 = vmatprep.subr.mxu0 0.0
    %215 = vmatpush1.xpose.msra.mxu0 0.0
    %216 = vmatprep.subr.mxu0 0.0
    %217 = vmatpush1.xpose.msra.mxu0 0.0
    %218 = vmatprep.subr.mxu0 0.0
    %219 = vmatpush1.xpose.msra.mxu0 0.0
    %220 = vmatprep.subr.mxu0 0.0
    %221 = vmatpush1.xpose.msra.mxu0 0.0
    %222 = vmatprep.subr.mxu0 0.0
    %223 = vmatpush1.xpose.msra.mxu0 0.0
    %224 = vmatprep.subr.mxu0 0.0
    %225 = vmatpush1.xpose.msra.mxu0 0.0
    %226 = vmatprep.subr.mxu0 0.0
    %227 = vmatpush1.xpose.msra.mxu0 0.0
    %228 = vmatprep.subr.mxu0 0.0
    %229 = vmatpush1.xpose.msra.mxu0 0.0
    %230 = vmatprep.subr.mxu0 0.0
    %231 = vmatpush1.xpose.msra.mxu0 0.0
    %232 = vmatprep.subr.mxu0 0.0
    %233 = vmatpush1.xpose.msra.mxu0 0.0
    %234 = vmatprep.mubr.f32.mxu0 0.0
    %235 = vmatmul.mubr.f32.gmra.mrb[0].mxu0 %v122
    %v236 = vpop.f32.mrb[0].mxu0
    %v237 = vadd.f32 0.0, %v236
    %v238 = vpop.f32.mrb[0].mxu0
    %239 = vmatprep.mubr.f32.mxu0 0.0
    %240 = vmatmul.mubr.f32.gmra.mrb[0].mxu0 %v123
    %v241 = vpop.f32.mrb[0].mxu0
    %v242 = vadd.f32 0.0, %v241
    %v243 = vpop.f32.mrb[0].mxu0
    %244 = vmatprep.mubr.f32.mxu0 0.0
    %245 = vmatmul.mubr.f32.gmra.mrb[0].mxu0 %v124
    %v246 = vpop.f32.mrb[0].mxu0
    %v247 = vadd.f32 0.0, %v246
    %v248 = vpop.f32.mrb[0].mxu0
    %249 = vmatprep.mubr.f32.mxu0 0.0
    %250 = vmatmul.mubr.f32.gmra.mrb[0].mxu0 %v125
    %v251 = vpop.f32.mrb[0].mxu0
    %v252 = vadd.f32 0.0, %v251
    %v253 = vpop.f32.mrb[0].mxu0
    %254 = vmatprep.mubr.f32.mxu0 0.0
    %255 = vmatmul.mubr.f32.gmra.mrb[0].mxu0 %v126
    %v256 = vpop.f32.mrb[0].mxu0
    %v257 = vadd.f32 0.0, %v256
    %v258 = vpop.f32.mrb[0].mxu0
    %259 = vmatprep.mubr.f32.mxu0 0.0
    %260 = vmatmul.mubr.f32.gmra.mrb[0].mxu0 %v127
    %v261 = vpop.f32.mrb[0].mxu0
    %v262 = vadd.f32 0.0, %v261
    %v263 = vpop.f32.mrb[0].mxu0
    %264 = vmatprep.mubr.f32.mxu0 0.0
    %265 = vmatmul.mubr.f32.gmra.mrb[0].mxu0 %v128
    %v266 = vpop.f32.mrb[0].mxu0
    %v267 = vadd.f32 0.0, %v266
    %v268 = vpop.f32.mrb[0].mxu0
    %269 = vmatprep.mubr.f32.mxu0 0.0
    %270 = vmatmul.mubr.f32.gmra.mrb[0].mxu0 %v129
    %v271 = vpop.f32.mrb[0].mxu0
    %v272 = vadd.f32 0.0, %v271
    %v273 = vpop.f32.mrb[0].mxu0
    %274 = vmatprep.mubr.f32.mxu0 0.0
    %275 = vmatmul.mubr.f32.gmra.mrb[0].mxu0 %v130
    %v276 = vpop.f32.mrb[0].mxu0
    %v277 = vadd.f32 0.0, %v276
    %v278 = vpop.f32.mrb[0].mxu0
    %279 = vmatprep.mubr.f32.mxu0 0.0
    %280 = vmatmul.mubr.f32.gmra.mrb[0].mxu0 %v131
    %v281 = vpop.f32.mrb[0].mxu0
    %v282 = vadd.f32 0.0, %v281
    %v283 = vpop.f32.mrb[0].mxu0
    %284 = vmatprep.mubr.f32.mxu0 0.0
    %285 = vmatmul.mubr.f32.gmra.mrb[0].mxu0 %v132
    %v286 = vpop.f32.mrb[0].mxu0
    %v287 = vadd.f32 0.0, %v286
    %v288 = vpop.f32.mrb[0].mxu0
    %289 = vmatprep.mubr.f32.mxu0 0.0
    %290 = vmatmul.mubr.f32.gmra.mrb[0].mxu0 %v133
    %v291 = vpop.f32.mrb[0].mxu0
    %v292 = vadd.f32 0.0, %v291
    %v293 = vpop.f32.mrb[0].mxu0
    %294 = vmatprep.mubr.f32.mxu0 0.0
    %295 = vmatmul.mubr.f32.gmra.mrb[0].mxu0 %v134
    %v296 = vpop.f32.mrb[0].mxu0
    %v297 = vadd.f32 0.0, %v296
    %v298 = vpop.f32.mrb[0].mxu0
    %299 = vmatprep.mubr.f32.mxu0 0.0
    %300 = vmatmul.mubr.f32.gmra.mrb[0].mxu0 %v135
    %v301 = vpop.f32.mrb[0].mxu0
    %v302 = vadd.f32 0.0, %v301
    %v303 = vpop.f32.mrb[0].mxu0
    %304 = vmatprep.mubr.f32.mxu0 0.0
    %305 = vmatmul.mubr.f32.gmra.mrb[0].mxu0 %v136
    %v306 = vpop.f32.mrb[0].mxu0
    %v307 = vadd.f32 0.0, %v306
    %v308 = vpop.f32.mrb[0].mxu0
    %309 = vmatprep.mubr.f32.mxu0 0.0
    %310 = vmatmul.mubr.f32.gmra.mrb[0].mxu0 %v137
    %v311 = vpop.f32.mrb[0].mxu0
    %v312 = vadd.f32 0.0, %v311
    %v313 = vpop.f32.mrb[0].mxu0
    %314 = vdwg.mxu0
    %v315 = vadd.f32 %v154, %v237
    %v316 = vadd.f32 %v155, %v242
    %v317 = vadd.f32 %v156, %v247
    %v318 = vadd.f32 %v157, %v252
    %v319 = vadd.f32 %v158, %v257
    %v320 = vadd.f32 %v159, %v262
    %v321 = vadd.f32 %v160, %v267
    %v322 = vadd.f32 %v161, %v272
    %v323 = vadd.f32 %v162, %v277
    %v324 = vadd.f32 %v163, %v282
    %v325 = vadd.f32 %v164, %v287
    %v326 = vadd.f32 %v165, %v292
    %v327 = vadd.f32 %v166, %v297
    %v328 = vadd.f32 %v167, %v302
    %v329 = vadd.f32 %v168, %v307
    %v330 = vadd.f32 %v169, %v312
    %331 = vst [vmem:[#allocation2] sm:$0xff] %v315
    %332 = vst [vmem:[#allocation2 + $0x8] sm:$0xff] %v316
    %333 = vst [vmem:[#allocation2 + $0x10] sm:$0xff] %v317
    %334 = vst [vmem:[#allocation2 + $0x18] sm:$0xff] %v318
    %335 = vst [vmem:[#allocation2 + $0x20] sm:$0xff] %v319
    %336 = vst [vmem:[#allocation2 + $0x28] sm:$0xff] %v320
    %337 = vst [vmem:[#allocation2 + $0x30] sm:$0xff] %v321
    %338 = vst [vmem:[#allocation2 + $0x38] sm:$0xff] %v322
    %339 = vst [vmem:[#allocation2 + $0x40] sm:$0xff] %v323
    %340 = vst [vmem:[#allocation2 + $0x48] sm:$0xff] %v324
    %341 = vst [vmem:[#allocation2 + $0x50] sm:$0xff] %v325
    %342 = vst [vmem:[#allocation2 + $0x58] sm:$0xff] %v326
    %343 = vst [vmem:[#allocation2 + $0x60] sm:$0xff] %v327
    %344 = vst [vmem:[#allocation2 + $0x68] sm:$0xff] %v328
    %345 = vst [vmem:[#allocation2 + $0x70] sm:$0xff] %v329
    %346 = vst [vmem:[#allocation2 + $0x78] sm:$0xff] %v330
    // Predicated region
    $region26: #{tpu_custom_call.1} parent=1 // pred_check
      %p347 = pneg %p102
    $region27: #{tpu_custom_call.1} parent=1 // pred_check_branch
      %349 = sbr.rel (%p347) target = $region29
    $region28: #{tpu_custom_call.1} parent=1 // pred_region
      %v350 = vld [vmem:[#allocation2] sm:$0xff]
      %v351 = vld [vmem:[#allocation2 + $0x8] sm:$0xff]
      %v352 = vld [vmem:[#allocation2 + $0x10] sm:$0xff]
      %v353 = vld [vmem:[#allocation2 + $0x18] sm:$0xff]
      %v354 = vld [vmem:[#allocation2 + $0x20] sm:$0xff]
      %v355 = vld [vmem:[#allocation2 + $0x28] sm:$0xff]
      %v356 = vld [vmem:[#allocation2 + $0x30] sm:$0xff]
      %v357 = vld [vmem:[#allocation2 + $0x38] sm:$0xff]
      %v358 = vld [vmem:[#allocation2 + $0x40] sm:$0xff]
      %v359 = vld [vmem:[#allocation2 + $0x48] sm:$0xff]
      %v360 = vld [vmem:[#allocation2 + $0x50] sm:$0xff]
      %v361 = vld [vmem:[#allocation2 + $0x58] sm:$0xff]
      %v362 = vld [vmem:[#allocation2 + $0x60] sm:$0xff]
      %v363 = vld [vmem:[#allocation2 + $0x68] sm:$0xff]
      %v364 = vld [vmem:[#allocation2 + $0x70] sm:$0xff]
      %v365 = vld [vmem:[#allocation2 + $0x78] sm:$0xff]
      %v366 = vld [vmem:[%s80] sm:$0x1]
      %v367 = vmul.f32 %v366, 2.0
      %v368 = vsub.f32 %v367, 1.0
      %v369 = vld [vmem:[%s87] sm:$0xff]
      %v370 = vld [vmem:[%s87 + $0x8] sm:$0xff]
      %v371 = vld [vmem:[%s87 + $0x10] sm:$0xff]
      %v372 = vld [vmem:[%s87 + $0x18] sm:$0xff]
      %v373 = vld [vmem:[%s87 + $0x20] sm:$0xff]
      %v374 = vld [vmem:[%s87 + $0x28] sm:$0xff]
      %v375 = vld [vmem:[%s87 + $0x30] sm:$0xff]
      %v376 = vld [vmem:[%s87 + $0x38] sm:$0xff]
      %v377 = vld [vmem:[%s87 + $0x40] sm:$0xff]
      %v378 = vld [vmem:[%s87 + $0x48] sm:$0xff]
      %v379 = vld [vmem:[%s87 + $0x50] sm:$0xff]
      %v380 = vld [vmem:[%s87 + $0x58] sm:$0xff]
      %v381 = vld [vmem:[%s87 + $0x60] sm:$0xff]
      %v382 = vld [vmem:[%s87 + $0x68] sm:$0xff]
      %v383 = vld [vmem:[%s87 + $0x70] sm:$0xff]
      %v384 = vld [vmem:[%s87 + $0x78] sm:$0xff]
      %v385 = vmul.f32 %v369, 2.0
      %v386 = vmul.f32 %v370, 2.0
      %v387 = vmul.f32 %v371, 2.0
      %v388 = vmul.f32 %v372, 2.0
      %v389 = vmul.f32 %v373, 2.0
      %v390 = vmul.f32 %v374, 2.0
      %v391 = vmul.f32 %v375, 2.0
      %v392 = vmul.f32 %v376, 2.0
      %v393 = vmul.f32 %v377, 2.0
      %v394 = vmul.f32 %v378, 2.0
      %v395 = vmul.f32 %v379, 2.0
      %v396 = vmul.f32 %v380, 2.0
      %v397 = vmul.f32 %v381, 2.0
      %v398 = vmul.f32 %v382, 2.0
      %v399 = vmul.f32 %v383, 2.0
      %v400 = vmul.f32 %v384, 2.0
      %v401 = vsub.f32 %v385, 1.0
      %v402 = vsub.f32 %v386, 1.0
      %v403 = vsub.f32 %v387, 1.0
      %v404 = vsub.f32 %v388, 1.0
      %v405 = vsub.f32 %v389, 1.0
      %v406 = vsub.f32 %v390, 1.0
      %v407 = vsub.f32 %v391, 1.0
      %v408 = vsub.f32 %v392, 1.0
      %v409 = vsub.f32 %v393, 1.0
      %v410 = vsub.f32 %v394, 1.0
      %v411 = vsub.f32 %v395, 1.0
      %v412 = vsub.f32 %v396, 1.0
      %v413 = vsub.f32 %v397, 1.0
      %v414 = vsub.f32 %v398, 1.0
      %v415 = vsub.f32 %v399, 1.0
      %v416 = vsub.f32 %v400, 1.0
      %v418 = vlaneseq
      %v419 = vshrl.u32 %v418, 7
      %v420 = vsub.s32 0, %v419
      %v421 = vrot.slane %v368, %v420
      %v423 = vmul.f32 %v421, %v350
      %v424 = vmul.f32 %v421, %v351
      %v425 = vmul.f32 %v421, %v352
      %v426 = vmul.f32 %v421, %v353
      %v427 = vmul.f32 %v421, %v354
      %v428 = vmul.f32 %v421, %v355
      %v429 = vmul.f32 %v421, %v356
      %v430 = vmul.f32 %v421, %v357
      %v431 = vmul.f32 %v421, %v358
      %v432 = vmul.f32 %v421, %v359
      %v433 = vmul.f32 %v421, %v360
      %v434 = vmul.f32 %v421, %v361
      %v435 = vmul.f32 %v421, %v362
      %v436 = vmul.f32 %v421, %v363
      %v437 = vmul.f32 %v421, %v364
      %v438 = vmul.f32 %v421, %v365
      %v439 = vsub.f32 1.0, %v423
      %v440 = vsub.f32 1.0, %v424
      %v441 = vsub.f32 1.0, %v425
      %v442 = vsub.f32 1.0, %v426
      %v443 = vsub.f32 1.0, %v427
      %v444 = vsub.f32 1.0, %v428
      %v445 = vsub.f32 1.0, %v429
      %v446 = vsub.f32 1.0, %v430
      %v447 = vsub.f32 1.0, %v431
      %v448 = vsub.f32 1.0, %v432
      %v449 = vsub.f32 1.0, %v433
      %v450 = vsub.f32 1.0, %v434
      %v451 = vsub.f32 1.0, %v435
      %v452 = vsub.f32 1.0, %v436
      %v453 = vsub.f32 1.0, %v437
      %v454 = vsub.f32 1.0, %v438
      %v455 = vmax.f32 %v439, 0.0
      %v456 = vmax.f32 %v440, 0.0
      %v457 = vmax.f32 %v441, 0.0
      %v458 = vmax.f32 %v442, 0.0
      %v459 = vmax.f32 %v443, 0.0
      %v460 = vmax.f32 %v444, 0.0
      %v461 = vmax.f32 %v445, 0.0
      %v462 = vmax.f32 %v446, 0.0
      %v463 = vmax.f32 %v447, 0.0
      %v464 = vmax.f32 %v448, 0.0
      %v465 = vmax.f32 %v449, 0.0
      %v466 = vmax.f32 %v450, 0.0
      %v467 = vmax.f32 %v451, 0.0
      %v468 = vmax.f32 %v452, 0.0
      %v469 = vmax.f32 %v453, 0.0
      %v470 = vmax.f32 %v454, 0.0
      %472 = vset.pattern.permute.xlu0 0
      %473 = vperm.xlu0 %472, %v401
      %v474 = vpop.permute.xlu0 %473
      %477 = vset.pattern.permute.xlu0 0
      %478 = vperm.xlu0 %477, %v402
      %v479 = vpop.permute.xlu0 %478
      %482 = vset.pattern.permute.xlu0 0
      %483 = vperm.xlu0 %482, %v403
      %v484 = vpop.permute.xlu0 %483
      %487 = vset.pattern.permute.xlu0 0
      %488 = vperm.xlu0 %487, %v404
      %v489 = vpop.permute.xlu0 %488
      %492 = vset.pattern.permute.xlu0 0
      %493 = vperm.xlu0 %492, %v405
      %v494 = vpop.permute.xlu0 %493
      %497 = vset.pattern.permute.xlu0 0
      %498 = vperm.xlu0 %497, %v406
      %v499 = vpop.permute.xlu0 %498
      %502 = vset.pattern.permute.xlu0 0
      %503 = vperm.xlu0 %502, %v407
      %v504 = vpop.permute.xlu0 %503
      %507 = vset.pattern.permute.xlu0 0
      %508 = vperm.xlu0 %507, %v408
      %v509 = vpop.permute.xlu0 %508
      %512 = vset.pattern.permute.xlu0 0
      %513 = vperm.xlu0 %512, %v409
      %v514 = vpop.permute.xlu0 %513
      %517 = vset.pattern.permute.xlu0 0
      %518 = vperm.xlu0 %517, %v410
      %v519 = vpop.permute.xlu0 %518
      %522 = vset.pattern.permute.xlu0 0
      %523 = vperm.xlu0 %522, %v411
      %v524 = vpop.permute.xlu0 %523
      %527 = vset.pattern.permute.xlu0 0
      %528 = vperm.xlu0 %527, %v412
      %v529 = vpop.permute.xlu0 %528
      %532 = vset.pattern.permute.xlu0 0
      %533 = vperm.xlu0 %532, %v413
      %v534 = vpop.permute.xlu0 %533
      %537 = vset.pattern.permute.xlu0 0
      %538 = vperm.xlu0 %537, %v414
      %v539 = vpop.permute.xlu0 %538
      %542 = vset.pattern.permute.xlu0 0
      %543 = vperm.xlu0 %542, %v415
      %v544 = vpop.permute.xlu0 %543
      %547 = vset.pattern.permute.xlu0 0
      %548 = vperm.xlu0 %547, %v416
      %v549 = vpop.permute.xlu0 %548
      %v551 = vmul.f32 %v474, %v350
      %v552 = vmul.f32 %v479, %v351
      %v553 = vmul.f32 %v484, %v352
      %v554 = vmul.f32 %v489, %v353
      %v555 = vmul.f32 %v494, %v354
      %v556 = vmul.f32 %v499, %v355
      %v557 = vmul.f32 %v504, %v356
      %v558 = vmul.f32 %v509, %v357
      %v559 = vmul.f32 %v514, %v358
      %v560 = vmul.f32 %v519, %v359
      %v561 = vmul.f32 %v524, %v360
      %v562 = vmul.f32 %v529, %v361
      %v563 = vmul.f32 %v534, %v362
      %v564 = vmul.f32 %v539, %v363
      %v565 = vmul.f32 %v544, %v364
      %v566 = vmul.f32 %v549, %v365
      %v567 = vsub.f32 1.0, %v551
      %v568 = vsub.f32 1.0, %v552
      %v569 = vsub.f32 1.0, %v553
      %v570 = vsub.f32 1.0, %v554
      %v571 = vsub.f32 1.0, %v555
      %v572 = vsub.f32 1.0, %v556
      %v573 = vsub.f32 1.0, %v557
      %v574 = vsub.f32 1.0, %v558
      %v575 = vsub.f32 1.0, %v559
      %v576 = vsub.f32 1.0, %v560
      %v577 = vsub.f32 1.0, %v561
      %v578 = vsub.f32 1.0, %v562
      %v579 = vsub.f32 1.0, %v563
      %v580 = vsub.f32 1.0, %v564
      %v581 = vsub.f32 1.0, %v565
      %v582 = vsub.f32 1.0, %v566
      %v583 = vmax.f32 %v567, 0.0
      %v584 = vmax.f32 %v568, 0.0
      %v585 = vmax.f32 %v569, 0.0
      %v586 = vmax.f32 %v570, 0.0
      %v587 = vmax.f32 %v571, 0.0
      %v588 = vmax.f32 %v572, 0.0
      %v589 = vmax.f32 %v573, 0.0
      %v590 = vmax.f32 %v574, 0.0
      %v591 = vmax.f32 %v575, 0.0
      %v592 = vmax.f32 %v576, 0.0
      %v593 = vmax.f32 %v577, 0.0
      %v594 = vmax.f32 %v578, 0.0
      %v595 = vmax.f32 %v579, 0.0
      %v596 = vmax.f32 %v580, 0.0
      %v597 = vmax.f32 %v581, 0.0
      %v598 = vmax.f32 %v582, 0.0
      %p599 = scmp.eq.s32.totalorder %s100, %s101
      %s600 = scalar_select %p599, 0.0, 1.0
      %v601 = vstv %s600
      %v602 = vmul.f32 %v601, %v583
      %v603 = vmul.f32 %v601, %v584
      %v604 = vmul.f32 %v601, %v585
      %v605 = vmul.f32 %v601, %v586
      %v606 = vmul.f32 %v601, %v587
      %v607 = vmul.f32 %v601, %v588
      %v608 = vmul.f32 %v601, %v589
      %v609 = vmul.f32 %v601, %v590
      %v610 = vmul.f32 %v601, %v591
      %v611 = vmul.f32 %v601, %v592
      %v612 = vmul.f32 %v601, %v593
      %v613 = vmul.f32 %v601, %v594
      %v614 = vmul.f32 %v601, %v595
      %v615 = vmul.f32 %v601, %v596
      %v616 = vmul.f32 %v601, %v597
      %v617 = vmul.f32 %v601, %v598
      %v618 = vadd.f32 %v455, %v602
      %v619 = vadd.f32 %v456, %v603
      %v620 = vadd.f32 %v457, %v604
      %v621 = vadd.f32 %v458, %v605
      %v622 = vadd.f32 %v459, %v606
      %v623 = vadd.f32 %v460, %v607
      %v624 = vadd.f32 %v461, %v608
      %v625 = vadd.f32 %v462, %v609
      %v626 = vadd.f32 %v463, %v610
      %v627 = vadd.f32 %v464, %v611
      %v628 = vadd.f32 %v465, %v612
      %v629 = vadd.f32 %v466, %v613
      %v630 = vadd.f32 %v467, %v614
      %v631 = vadd.f32 %v468, %v615
      %v632 = vadd.f32 %v469, %v616
      %v633 = vadd.f32 %v470, %v617
      %s634 = smul.u32 %s100, 128
      %v635 = vlaneseq
      %v636 = vshrl.u32 %v635, 7
      %v637 = vadd.s32 %v636, 8
      %v638 = vadd.s32 %v636, 16
      %v639 = vadd.s32 %v636, 24
      %v640 = vadd.s32 %v636, 32
      %v641 = vadd.s32 %v636, 40
      %v642 = vadd.s32 %v636, 48
      %v643 = vadd.s32 %v636, 56
      %v644 = vadd.s32 %v636, 64
      %v645 = vadd.s32 %v636, 72
      %v646 = vadd.s32 %v636, 80
      %v647 = vadd.s32 %v636, 88
      %v648 = vadd.s32 %v636, 96
      %v649 = vadd.s32 %v636, 104
      %v650 = vadd.s32 %v636, 112
      %v651 = vadd.s32 %v636, 120
      %v652 = vstv %s634
      %v653 = vadd.s32 %v652, %v636
      %v654 = vadd.s32 %v652, %v637
      %v655 = vadd.s32 %v652, %v638
      %v656 = vadd.s32 %v652, %v639
      %v657 = vadd.s32 %v652, %v640
      %v658 = vadd.s32 %v652, %v641
      %v659 = vadd.s32 %v652, %v642
      %v660 = vadd.s32 %v652, %v643
      %v661 = vadd.s32 %v652, %v644
      %v662 = vadd.s32 %v652, %v645
      %v663 = vadd.s32 %v652, %v646
      %v664 = vadd.s32 %v652, %v647
      %v665 = vadd.s32 %v652, %v648
      %v666 = vadd.s32 %v652, %v649
      %v667 = vadd.s32 %v652, %v650
      %v668 = vadd.s32 %v652, %v651
      %s669 = smul.u32 %s101, 128
      %v670 = vlaneseq
      %v671 = vand.u32 %v670, 127
      %v672 = vstv %s669
      %v673 = vadd.s32 %v672, %v671
      %vm674 = vcmp.lt.s32.totalorder %v653, 8
      %vm675 = vcmp.lt.s32.totalorder %v654, 8
      %vm676 = vcmp.lt.s32.totalorder %v655, 8
      %vm677 = vcmp.lt.s32.totalorder %v656, 8
      %vm678 = vcmp.lt.s32.totalorder %v657, 8
      %vm679 = vcmp.lt.s32.totalorder %v658, 8
      %vm680 = vcmp.lt.s32.totalorder %v659, 8
      %vm681 = vcmp.lt.s32.totalorder %v660, 8
      %vm682 = vcmp.lt.s32.totalorder %v661, 8
      %vm683 = vcmp.lt.s32.totalorder %v662, 8
      %vm684 = vcmp.lt.s32.totalorder %v663, 8
      %vm685 = vcmp.lt.s32.totalorder %v664, 8
      %vm686 = vcmp.lt.s32.totalorder %v665, 8
      %vm687 = vcmp.lt.s32.totalorder %v666, 8
      %vm688 = vcmp.lt.s32.totalorder %v667, 8
      %vm689 = vcmp.lt.s32.totalorder %v668, 8
      %v690 = vsel %vm674, 1, 0
      %v691 = vsel %vm675, 1, 0
      %v692 = vsel %vm676, 1, 0
      %v693 = vsel %vm677, 1, 0
      %v694 = vsel %vm678, 1, 0
      %v695 = vsel %vm679, 1, 0
      %v696 = vsel %vm680, 1, 0
      %v697 = vsel %vm681, 1, 0
      %v698 = vsel %vm682, 1, 0
      %v699 = vsel %vm683, 1, 0
      %v700 = vsel %vm684, 1, 0
      %v701 = vsel %vm685, 1, 0
      %v702 = vsel %vm686, 1, 0
      %v703 = vsel %vm687, 1, 0
      %v704 = vsel %vm688, 1, 0
      %v705 = vsel %vm689, 1, 0
      %v706 = vcvt.s32.f32 %v690
      %v707 = vcvt.s32.f32 %v691
      %v708 = vcvt.s32.f32 %v692
      %v709 = vcvt.s32.f32 %v693
      %v710 = vcvt.s32.f32 %v694
      %v711 = vcvt.s32.f32 %v695
      %v712 = vcvt.s32.f32 %v696
      %v713 = vcvt.s32.f32 %v697
      %v714 = vcvt.s32.f32 %v698
      %v715 = vcvt.s32.f32 %v699
      %v716 = vcvt.s32.f32 %v700
      %v717 = vcvt.s32.f32 %v701
      %v718 = vcvt.s32.f32 %v702
      %v719 = vcvt.s32.f32 %v703
      %v720 = vcvt.s32.f32 %v704
      %v721 = vcvt.s32.f32 %v705
      %v722 = vmul.f32 %v618, %v706
      %v723 = vmul.f32 %v619, %v707
      %v724 = vmul.f32 %v620, %v708
      %v725 = vmul.f32 %v621, %v709
      %v726 = vmul.f32 %v622, %v710
      %v727 = vmul.f32 %v623, %v711
      %v728 = vmul.f32 %v624, %v712
      %v729 = vmul.f32 %v625, %v713
      %v730 = vmul.f32 %v626, %v714
      %v731 = vmul.f32 %v627, %v715
      %v732 = vmul.f32 %v628, %v716
      %v733 = vmul.f32 %v629, %v717
      %v734 = vmul.f32 %v630, %v718
      %v735 = vmul.f32 %v631, %v719
      %v736 = vmul.f32 %v632, %v720
      %v737 = vmul.f32 %v633, %v721
      %vm738 = vcmp.lt.s32.totalorder %v673, 8
      %v739 = vsel %vm738, 1, 0
      %v740 = vcvt.s32.f32 %v739
      %v741 = vmul.f32 %v722, %v740
      %v742 = vmul.f32 %v723, %v740
      %v743 = vmul.f32 %v724, %v740
      %v744 = vmul.f32 %v725, %v740
      %v745 = vmul.f32 %v726, %v740
      %v746 = vmul.f32 %v727, %v740
      %v747 = vmul.f32 %v728, %v740
      %v748 = vmul.f32 %v729, %v740
      %v749 = vmul.f32 %v730, %v740
      %v750 = vmul.f32 %v731, %v740
      %v751 = vmul.f32 %v732, %v740
      %v752 = vmul.f32 %v733, %v740
      %v753 = vmul.f32 %v734, %v740
      %v754 = vmul.f32 %v735, %v740
      %v755 = vmul.f32 %v736, %v740
      %v756 = vmul.f32 %v737, %v740
      %v757 = vadd.f32 %v741, %v742
      %v758 = vadd.f32 %v757, %v743
      %v759 = vadd.f32 %v758, %v744
      %v760 = vadd.f32 %v759, %v745
      %v761 = vadd.f32 %v760, %v746
      %v762 = vadd.f32 %v761, %v747
      %v763 = vadd.f32 %v762, %v748
      %v764 = vadd.f32 %v763, %v749
      %v765 = vadd.f32 %v764, %v750
      %v766 = vadd.f32 %v765, %v751
      %v767 = vadd.f32 %v766, %v752
      %v768 = vadd.f32 %v767, %v753
      %v769 = vadd.f32 %v768, %v754
      %v770 = vadd.f32 %v769, %v755
      %v771 = vadd.f32 %v770, %v756
      %772 = vst [vmem:[#allocation9] sm:$0xff] %v771
    $region29: #{tpu_custom_call.1} parent=1 // pred_fallthru
      _
    // Predicated region
    $region30: #{tpu_custom_call.1} parent=1 // pred_check
      _
    $region31: #{tpu_custom_call.1} parent=1 // pred_check_branch
      %774 = sbr.rel (0) target = $region33
    $region32: #{tpu_custom_call.1} parent=1 // pred_region
      %s776 = ssub.s32 128, 128
      %777 = vsyncadd [#allocation8], %s776
      %s779 = sshll.u32 [#allocation9], 4
      %s780 = int_to_ptr.vmem [resolvable:$true] %s779
      %782 = dma.vmem_to_hbm [thread:$0]  %s780, 128, %s6, [#allocation8]
    $region33: #{tpu_custom_call.1} parent=1 // pred_fallthru
      _
    // Predicated region
    $region34: #{tpu_custom_call.1} parent=1 // pred_check
      _
    $region35: #{tpu_custom_call.1} parent=1 // pred_check_branch
      %784 = sbr.rel (0) target = $region37
    $region36: #{tpu_custom_call.1} parent=1 // pred_region
      %785 = dma.done [#allocation8], 128
    $region37: #{tpu_custom_call.1} parent=1 // pred_fallthru
      _
    %786 = vsyncpa [#allocation7], 1
    %787 = vsyncpa [#allocation8], 1

</llo_original>
